<compile_context>
chip_gen: v7x
topology: tpu7x:2x2x1
jax: 0.10.0
libtpu: 0.0.40
codegen_flags: <defaults>
</compile_context>

<pallas_src>
import functools

import jax
import jax.numpy as jnp
from jax.experimental import pallas as pl
from jax.experimental.pallas import tpu as pltpu


# --------------------------------------------------------------------------
# helpers
# --------------------------------------------------------------------------
def _round_up(x, m):
    return (x + m - 1) // m * m


def _pack_gate_cols(w, h, hp):
    """Reorder [..., 4*h] gate columns into lane-aligned [..., 4*hp] blocks.

    PyTorch column order (i | f | g | o), each `h` wide, becomes four
    `hp`-wide blocks (hp = round_up(h, 128)): each gate's real columns sit at
    the head of its block, zero padding after.  In-kernel gate slices are
    therefore 128-lane aligned and never cut inside a vreg.
    """
    lead = w.shape[:-1]
    w4 = w.reshape(*lead, 4, h)
    w4 = jnp.pad(w4, [(0, 0)] * len(lead) + [(0, 0), (0, hp - h)])
    return w4.reshape(*lead, 4 * hp)


def _vmem_limit(block_bytes):
    # double-buffered blocks + headroom; stay well inside v7x's 64 MiB VMEM.
    est = 2 * block_bytes + (4 << 20)
    return int(max(32 << 20, min(est, 48 << 20)))


def _lstm_gates(states, c_prev, hp):
    """Module-exact gate math, all in f32.

    NOTE: reproduces the PyTorch module exactly (NOT the textbook LSTM):
        ct = c_{t-1} * sigmoid(i) + sigmoid(f) * tanh(g)
        ht = tanh(ct) * sigmoid(o)
    """
    i_s = jax.nn.sigmoid(states[:, 0 * hp:1 * hp])
    f_s = jax.nn.sigmoid(states[:, 1 * hp:2 * hp])
    g_s = jnp.tanh(states[:, 2 * hp:3 * hp])
    o_s = jax.nn.sigmoid(states[:, 3 * hp:4 * hp])
    ct = c_prev * i_s + f_s * g_s
    ht = jnp.tanh(ct) * o_s
    return ht, ct


# --------------------------------------------------------------------------
# single-step kernel (the module's forward)
# --------------------------------------------------------------------------
def _lstm_cell_kernel(zx_ref, c_ref, w_ref, b_ref, ht_ref, ct_ref, *, hp):
    # ONE fused MXU matmul: [TB, Kp] @ [Kp, 4*Hp], f32 accumulation.
    states = jnp.dot(zx_ref[...], w_ref[...],
                     preferred_element_type=jnp.float32) + b_ref[...]
    ht, ct = _lstm_gates(states, c_ref[...].astype(jnp.float32), hp)
    ht_ref[...] = ht.astype(ht_ref.dtype)
    ct_ref[...] = ct.astype(ct_ref.dtype)


def lstm_block(x, h_prev, c_prev, w_ih, b_ih, w_hh, b_hh, *,
               param_dtype=jnp.bfloat16, block_b=256):
    """One LSTMblock forward step (matches the PyTorch module).

    x:      [B, D]
    h_prev: [B, H]
    c_prev: [B, H]
    w_ih:   [D, 4H]   (transposed vs torch.nn.Linear.weight; gate order i,f,g,o)
    b_ih:   [1, 4H]
    w_hh:   [H, 4H]
    b_hh:   [1, 4H]
    returns (ht, ct), each [B, H].
    """
    B, D = x.shape
    H = h_prev.shape[-1]
    Hp = _round_up(H, 128)
    K = D + H
    Kp = _round_up(K, 8)
    TB = min(block_b, _round_up(B, 8))
    Bp = _round_up(B, TB)
    out_dtype = x.dtype
    p_itemsize = jnp.dtype(param_dtype).itemsize

    # fused LHS [x | h_prev] -> one matmul instead of two short-K ones
    zx = jnp.concatenate([x, h_prev], axis=-1)
    zx = jnp.pad(zx, ((0, Bp - B), (0, Kp - K))).astype(param_dtype)

    # fused, gate-lane-aligned RHS [[W_ih],[W_hh]] and pre-summed bias
    w = jnp.concatenate([w_ih, w_hh], axis=0)                       # [K, 4H]
    w = _pack_gate_cols(w, H, Hp)                                   # [K, 4Hp]
    w = jnp.pad(w, ((0, Kp - K), (0, 0))).astype(param_dtype)       # [Kp, 4Hp]
    bias = _pack_gate_cols(b_ih + b_hh, H, Hp).astype(jnp.float32)  # [1, 4Hp]

    c = jnp.pad(c_prev, ((0, Bp - B), (0, Hp - H))).astype(out_dtype)

    blk_bytes = (Kp * 4 * Hp * p_itemsize   # fused weight (resident across tiles)
                 + TB * Kp * p_itemsize     # zx tile
                 + TB * Hp * 4              # c tile
                 + 4 * Hp * 4               # bias
                 + 2 * TB * Hp * 4          # ht / ct tiles
                 + TB * 4 * Hp * 4)         # f32 states temporary

    kernel = functools.partial(_lstm_cell_kernel, hp=Hp)
    ht, ct = pl.pallas_call(
        kernel,
        out_shape=(jax.ShapeDtypeStruct((Bp, Hp), out_dtype),
                   jax.ShapeDtypeStruct((Bp, Hp), out_dtype)),
        grid_spec=pltpu.PrefetchScalarGridSpec(
            num_scalar_prefetch=0,
            grid=(Bp // TB,),
            in_specs=[
                pl.BlockSpec((TB, Kp), lambda i: (i, 0)),       # [x|h] tile
                pl.BlockSpec((TB, Hp), lambda i: (i, 0)),       # c_prev tile
                pl.BlockSpec((Kp, 4 * Hp), lambda i: (0, 0)),   # fused W (resident)
                pl.BlockSpec((1, 4 * Hp), lambda i: (0, 0)),    # fused bias
            ],
            out_specs=(
                pl.BlockSpec((TB, Hp), lambda i: (i, 0)),       # ht
                pl.BlockSpec((TB, Hp), lambda i: (i, 0)),       # ct
            ),
        ),
        input_output_aliases={1: 1},   # reuse c_prev's buffer for ct
        compiler_params=pltpu.CompilerParams(
            dimension_semantics=("parallel",),  # batch tiles shard across TCs (v7x)
            vmem_limit_bytes=_vmem_limit(blk_bytes),
        ),
    )(zx, c, w, bias)
    return ht[:B, :H], ct[:B, :H]


# --------------------------------------------------------------------------
# sequence kernel: weights stay VMEM-resident across all T timesteps
# --------------------------------------------------------------------------
def _lstm_seq_kernel(xp_ref, w_hh_ref, h0_ref, c0_ref,
                     hts_ref, ct_ref, h_scr, c_scr, *, hp):
    @pl.when(pl.program_id(0) == 0)
    def _():
        h_scr[...] = h0_ref[...]
        c_scr[...] = c0_ref[...]

    # recurrent projection only: [Bp, Hp] @ [Hp, 4Hp]; W_hh has a constant
    # index_map so it is DMA'd from HBM once and stays resident in VMEM.
    states = xp_ref[0] + jnp.dot(h_scr[...].astype(w_hh_ref.dtype),
                                 w_hh_ref[...],
                                 preferred_element_type=jnp.float32)
    ht, ct = _lstm_gates(states, c_scr[...], hp)
    h_scr[...] = ht
    c_scr[...] = ct
    hts_ref[0] = ht.astype(hts_ref.dtype)
    ct_ref[...] = ct.astype(ct_ref.dtype)


def lstm_sequence(xs, h0, c0, w_ih, b_ih, w_hh, b_hh, *,
                  param_dtype=jnp.bfloat16):
    """Runs the LSTMblock cell over a whole [T, B, D] sequence in ONE
    pallas_call.  The time-parallel x @ W_ih + b projection is hoisted into a
    single large MXU matmul; the kernel's grid iterates over T with h/c
    carried in VMEM scratch.  Returns (all h_t [T,B,H], final c_T [B,H])."""
    T, B, D = xs.shape
    H = h0.shape[-1]
    Hp = _round_up(H, 128)
    Bp = _round_up(B, 8)
    out_dtype = xs.dtype
    p_itemsize = jnp.dtype(param_dtype).itemsize

    w_ih_p = _pack_gate_cols(w_ih, H, Hp)                            # [D, 4Hp]
    w_hh_p = _pack_gate_cols(w_hh, H, Hp)                            # [H, 4Hp]
    w_hh_p = jnp.pad(w_hh_p, ((0, Hp - H), (0, 0))).astype(param_dtype)
    bias = _pack_gate_cols(b_ih + b_hh, H, Hp).astype(jnp.float32)   # [1, 4Hp]

    # one big MXU-friendly slab matmul for the non-recurrent projection
    xp = jnp.dot(xs.reshape(T * B, D).astype(param_dtype),
                 w_ih_p.astype(param_dtype),
                 preferred_element_type=jnp.float32) + bias
    xp = xp.reshape(T, B, 4 * Hp)
    xp = jnp.pad(xp, ((0, 0), (0, Bp - B), (0, 0)))

    h0_p = jnp.pad(h0, ((0, Bp - B), (0, Hp - H))).astype(jnp.float32)
    c0_p = jnp.pad(c0, ((0, Bp - B), (0, Hp - H))).astype(jnp.float32)

    blk_bytes = (Bp * 4 * Hp * 4              # xp timestep tile (f32)
                 + Hp * 4 * Hp * p_itemsize   # resident recurrent weight
                 + 2 * Bp * Hp * 4            # h0 / c0
                 + 2 * Bp * Hp * 4            # hts tile + ct
                 + 2 * Bp * Hp * 4            # h / c scratch carry
                 + Bp * 4 * Hp * 4)           # f32 gate temporaries

    kernel = functools.partial(_lstm_seq_kernel, hp=Hp)
    hts, ct = pl.pallas_call(
        kernel,
        out_shape=(jax.ShapeDtypeStruct((T, Bp, Hp), out_dtype),
                   jax.ShapeDtypeStruct((Bp, Hp), out_dtype)),
        grid_spec=pltpu.PrefetchScalarGridSpec(
            num_scalar_prefetch=0,
            grid=(T,),
            in_specs=[
                pl.BlockSpec((1, Bp, 4 * Hp), lambda t: (t, 0, 0)),  # x-proj_t
                pl.BlockSpec((Hp, 4 * Hp), lambda t: (0, 0)),        # W_hh resident
                pl.BlockSpec((Bp, Hp), lambda t: (0, 0)),            # h0
                pl.BlockSpec((Bp, Hp), lambda t: (0, 0)),            # c0
            ],
            out_specs=(
                pl.BlockSpec((1, Bp, Hp), lambda t: (t, 0, 0)),      # all h_t
                pl.BlockSpec((Bp, Hp), lambda t: (0, 0)),            # final c_T
            ),
            scratch_shapes=[pltpu.VMEM((Bp, Hp), jnp.float32),
                            pltpu.VMEM((Bp, Hp), jnp.float32)],
        ),
        compiler_params=pltpu.CompilerParams(
            dimension_semantics=("arbitrary",),  # sequential recurrent carry
            vmem_limit_bytes=_vmem_limit(blk_bytes),
        ),
    )(xp, w_hh_p, h0_p, c0_p)
    return hts[:, :B, :H], ct[:B, :H]


# --------------------------------------------------------------------------
# references (pure JAX) — `cast` emulates the kernel's bf16 rounding
# --------------------------------------------------------------------------
def _ref_step(x, h_prev, c_prev, w_ih, b_ih, w_hh, b_hh, H, cast=None):
    r = ((lambda a: a.astype(cast).astype(jnp.float32)) if cast is not None
         else (lambda a: a))
    states = r(x) @ r(w_ih) + r(h_prev) @ r(w_hh) + b_ih + b_hh
    i, f, g, o = (states[:, k * H:(k + 1) * H] for k in range(4))
    ct = c_prev * jax.nn.sigmoid(i) + jax.nn.sigmoid(f) * jnp.tanh(g)
    ht = jnp.tanh(ct) * jax.nn.sigmoid(o)
    return ht, ct


def _ref_seq(xs, h0, c0, w_ih, b_ih, w_hh, b_hh, H, cast=None):
    r = ((lambda a: a.astype(cast).astype(jnp.float32)) if cast is not None
         else (lambda a: a))
    xp = r(xs) @ r(w_ih) + b_ih + b_hh          # [T, B, 4H]

    def step(carry, xp_t):
        h, c = carry
        states = xp_t + r(h) @ r(w_hh)
        i, f, g, o = (states[:, k * H:(k + 1) * H] for k in range(4))
        c_new = c * jax.nn.sigmoid(i) + jax.nn.sigmoid(f) * jnp.tanh(g)
        h_new = jnp.tanh(c_new) * jax.nn.sigmoid(o)
        return (h_new, c_new), h_new

    (_, c_T), hs = jax.lax.scan(step, (h0, c0), xp)
    return hs, c_T


# --------------------------------------------------------------------------
if __name__ == "__main__":
    B, D, H, T = 8, 16, 32, 12   # batch, input_size, hidden_size, seq len

    key = jax.random.PRNGKey(0)
    kx, kh, kc, kw1, kb1, kw2, kb2, ks = jax.random.split(key, 8)

    x = jax.random.normal(kx, (B, D), jnp.float32)
    h_prev = jax.random.normal(kh, (B, H), jnp.float32)
    c_prev = jax.random.normal(kc, (B, H), jnp.float32)
    xs = jax.random.normal(ks, (T, B, D), jnp.float32)

    lim_ih = 1.0 / jnp.sqrt(D)
    lim_hh = 1.0 / jnp.sqrt(H)
    w_ih = jax.random.uniform(kw1, (D, 4 * H), jnp.float32, -lim_ih, lim_ih)
    b_ih = jax.random.uniform(kb1, (1, 4 * H), jnp.float32, -lim_ih, lim_ih)
    w_hh = jax.random.uniform(kw2, (H, 4 * H), jnp.float32, -lim_hh, lim_hh)
    b_hh = jax.random.uniform(kb2, (1, 4 * H), jnp.float32, -lim_hh, lim_hh)

    # ---- single LSTMblock step (the module's forward) ---------------------
    step_fn = jax.jit(lstm_block)
    ht, ct = step_fn(x, h_prev, c_prev, w_ih, b_ih, w_hh, b_hh)
    jax.block_until_ready((ht, ct))
    assert ht.shape == (B, H) and ct.shape == (B, H)

    # tight check vs. a reference that emulates the kernel's bf16 rounding
    ht_q, ct_q = _ref_step(x, h_prev, c_prev, w_ih, b_ih, w_hh, b_hh, H,
                           cast=jnp.bfloat16)
    assert jnp.allclose(ht, ht_q, atol=2e-3, rtol=2e-3)
    assert jnp.allclose(ct, ct_q, atol=2e-3, rtol=2e-3)

    # loose check vs. the pure-f32 module semantics
    ht_f, ct_f = _ref_step(x, h_prev, c_prev, w_ih, b_ih, w_hh, b_hh, H)
    assert jnp.allclose(ht, ht_f, atol=5e-2, rtol=5e-2)
    assert jnp.allclose(ct, ct_f, atol=5e-2, rtol=5e-2)

    # ---- sequence driver: W_hh resident in VMEM across all T steps --------
    seq_fn = jax.jit(lstm_sequence)
    hts, ct_T = seq_fn(xs, h_prev, c_prev, w_ih, b_ih, w_hh, b_hh)
    jax.block_until_ready((hts, ct_T))
    assert hts.shape == (T, B, H) and ct_T.shape == (B, H)

    hts_q, ct_T_q = _ref_seq(xs, h_prev, c_prev, w_ih, b_ih, w_hh, b_hh, H,
                             cast=jnp.bfloat16)
    assert jnp.allclose(hts, hts_q, atol=5e-3, rtol=5e-3)
    assert jnp.allclose(ct_T, ct_T_q, atol=5e-3, rtol=5e-3)

    print("KERNEL_OK")
</pallas_src>

<mosaic_0001>
module attributes {stable_mosaic.version = 11 : i64} {
  func.func @_lstm_cell_kernel(%arg0: i32, %arg1: memref<8x48xbf16, #tpu.memory_space<vmem>>, %arg2: memref<8x128xf32, #tpu.memory_space<vmem>>, %arg3: memref<48x512xbf16, #tpu.memory_space<vmem>>, %arg4: memref<1x512xf32, #tpu.memory_space<vmem>>, %arg5: memref<8x128xf32, #tpu.memory_space<vmem>>, %arg6: memref<8x128xf32, #tpu.memory_space<vmem>>) attributes {dimension_semantics = [#tpu.dimension_semantics<parallel>], iteration_bounds = array<i64: 1>, scalar_prefetch = 0 : i64, scratch_operands = 0 : i64, tpu.core_type = #tpu.core_type<tc>, window_params = [{transform_indices = @transform_0, window_bounds = array<i64: 8, 48>}, {transform_indices = @transform_1, window_bounds = array<i64: 8, 128>}, {pipeline_mode = #tpu.pipeline_mode<synchronous>, transform_indices = @transform_2, window_bounds = array<i64: 48, 512>}, {pipeline_mode = #tpu.pipeline_mode<synchronous>, transform_indices = @transform_3, window_bounds = array<i64: 1, 512>}, {transform_indices = @transform_4, window_bounds = array<i64: 8, 128>}, {transform_indices = @transform_5, window_bounds = array<i64: 8, 128>}]} {
    %c0 = arith.constant 0 : index
    %c0_0 = arith.constant 0 : index
    %0 = vector.load %arg1[%c0, %c0_0] : memref<8x48xbf16, #tpu.memory_space<vmem>>, vector<8x48xbf16>
    %c0_1 = arith.constant 0 : index
    %c0_2 = arith.constant 0 : index
    %1 = vector.load %arg3[%c0_1, %c0_2] : memref<48x512xbf16, #tpu.memory_space<vmem>>, vector<48x512xbf16>
    %cst = arith.constant dense<0.000000e+00> : vector<8x512xf32>
    %2 = tpu.matmul %0, %1, %cst {dimension_numbers = #tpu.dot_dimension_numbers<[1], [0], [0], [1], [0, 0, 1, 1], [], []>} : vector<8x48xbf16>, vector<48x512xbf16>, vector<8x512xf32> -> vector<8x512xf32>
    %c0_3 = arith.constant 0 : index
    %c0_4 = arith.constant 0 : index
    %3 = vector.load %arg4[%c0_3, %c0_4] : memref<1x512xf32, #tpu.memory_space<vmem>>, vector<1x512xf32>
    %4 = vector.broadcast %3 : vector<1x512xf32> to vector<8x512xf32>
    %5 = arith.addf %2, %4 : vector<8x512xf32>
    %c0_5 = arith.constant 0 : index
    %c0_6 = arith.constant 0 : index
    %6 = vector.load %arg2[%c0_5, %c0_6] : memref<8x128xf32, #tpu.memory_space<vmem>>, vector<8x128xf32>
    %7 = vector.extract_strided_slice %5 {offsets = [0, 0], sizes = [8, 128], strides = [1, 1]} : vector<8x512xf32> to vector<8x128xf32>
    %8 = arith.negf %7 : vector<8x128xf32>
    %9 = math.exp %8 : vector<8x128xf32>
    %cst_7 = arith.constant 1.000000e+00 : f32
    %10 = vector.broadcast %cst_7 : f32 to vector<8x128xf32>
    %11 = arith.addf %10, %9 : vector<8x128xf32>
    %12 = arith.divf %10, %11 : vector<8x128xf32>
    %13 = vector.extract_strided_slice %5 {offsets = [0, 128], sizes = [8, 128], strides = [1, 1]} : vector<8x512xf32> to vector<8x128xf32>
    %14 = arith.negf %13 : vector<8x128xf32>
    %15 = math.exp %14 : vector<8x128xf32>
    %cst_8 = arith.constant 1.000000e+00 : f32
    %16 = vector.broadcast %cst_8 : f32 to vector<8x128xf32>
    %17 = arith.addf %16, %15 : vector<8x128xf32>
    %18 = arith.divf %16, %17 : vector<8x128xf32>
    %19 = vector.extract_strided_slice %5 {offsets = [0, 256], sizes = [8, 128], strides = [1, 1]} : vector<8x512xf32> to vector<8x128xf32>
    %20 = math.tanh %19 : vector<8x128xf32>
    %21 = vector.extract_strided_slice %5 {offsets = [0, 384], sizes = [8, 128], strides = [1, 1]} : vector<8x512xf32> to vector<8x128xf32>
    %22 = arith.negf %21 : vector<8x128xf32>
    %23 = math.exp %22 : vector<8x128xf32>
    %cst_9 = arith.constant 1.000000e+00 : f32
    %24 = vector.broadcast %cst_9 : f32 to vector<8x128xf32>
    %25 = arith.addf %24, %23 : vector<8x128xf32>
    %26 = arith.divf %24, %25 : vector<8x128xf32>
    %27 = arith.mulf %6, %12 : vector<8x128xf32>
    %28 = arith.mulf %18, %20 : vector<8x128xf32>
    %29 = arith.addf %27, %28 : vector<8x128xf32>
    %30 = math.tanh %29 : vector<8x128xf32>
    %31 = arith.mulf %30, %26 : vector<8x128xf32>
    %c0_10 = arith.constant 0 : index
    %c0_11 = arith.constant 0 : index
    %32 = vector.load %arg5[%c0_10, %c0_11] : memref<8x128xf32, #tpu.memory_space<vmem>>, vector<8x128xf32>
    tpu.vector_store %arg5[%c0_10, %c0_11], %31 {strides = array<i32>} : memref<8x128xf32, #tpu.memory_space<vmem>>, vector<8x128xf32>,
    %c0_12 = arith.constant 0 : index
    %c0_13 = arith.constant 0 : index
    %33 = vector.load %arg6[%c0_12, %c0_13] : memref<8x128xf32, #tpu.memory_space<vmem>>, vector<8x128xf32>
    tpu.vector_store %arg6[%c0_12, %c0_13], %29 {strides = array<i32>} : memref<8x128xf32, #tpu.memory_space<vmem>>, vector<8x128xf32>,
    return
  }
  func.func @transform_0(%arg0: i32) -> (i32, i32) {
    %c0_i32 = arith.constant 0 : i32
    %c0_i32_0 = arith.constant 0 : i32
    return %arg0, %c0_i32 : i32, i32
  }
  func.func @transform_1(%arg0: i32) -> (i32, i32) {
    %c0_i32 = arith.constant 0 : i32
    %c0_i32_0 = arith.constant 0 : i32
    return %arg0, %c0_i32 : i32, i32
  }
  func.func @transform_2(%arg0: i32) -> (i32, i32) {
    %c0_i32 = arith.constant 0 : i32
    %c0_i32_0 = arith.constant 0 : i32
    %c0_i32_1 = arith.constant 0 : i32
    return %c0_i32, %c0_i32_0 : i32, i32
  }
  func.func @transform_3(%arg0: i32) -> (i32, i32) {
    %c0_i32 = arith.constant 0 : i32
    %c0_i32_0 = arith.constant 0 : i32
    %c0_i32_1 = arith.constant 0 : i32
    return %c0_i32, %c0_i32_0 : i32, i32
  }
  func.func @transform_4(%arg0: i32) -> (i32, i32) {
    %c0_i32 = arith.constant 0 : i32
    %c0_i32_0 = arith.constant 0 : i32
    return %arg0, %c0_i32 : i32, i32
  }
  func.func @transform_5(%arg0: i32) -> (i32, i32) {
    %c0_i32 = arith.constant 0 : i32
    %c0_i32_0 = arith.constant 0 : i32
    return %arg0, %c0_i32 : i32, i32
  }
}

</mosaic_0001>

<llo_original>
// kernel: lstm_block.1
$region0: #{lstm_block.1}
  #allocation0 [shape = 'u32[]', space=smem, size = 0x4, offset = 0x4, fixed_abs, tag = 'smem constant byte address 0x4 - core index']
  #allocation1 [shape = 'u32[144,128]{1,0:T(1,128)}', space=vmem, size = 0x12000, scoped, tag = 'internal scratch']
  %s0 = inlined_call_operand.vmem [shape: bf16[8,48], index: 0, kind: input, shape index: {}]
  %s1 = inlined_call_operand.vmem [shape: f32[8,128], index: 1, kind: input, shape index: {}, may-alias: {1,5}]
  %s2 = inlined_call_operand.vmem [shape: bf16[48,512], index: 2, kind: input, shape index: {}]
  %s3 = inlined_call_operand.vmem [shape: f32[1,512], index: 3, kind: input, shape index: {}]
  %s4 = inlined_call_operand.hbm [shape: f32[8,128], index: 4, kind: output, shape index: {0}]
  %s5 = inlined_call_operand.vmem [shape: f32[8,128], index: 5, kind: output, shape index: {1}, may-alias: {1,5}]
  %6 = xla_tuple %s4, %s5
  %s7 = sld [smem:[#allocation0]]
  $region34: #{lstm_block.1} parent=0
    _
  %s9 = ssub.s32 1, %s7
  %s10 = scalar_select 0, %s9, %s7
  $region1: #{lstm_block.1} parent=0
    #allocation2 [shape = 'u8[4096]{0}', space=vmem, size = 0x1000, scoped, tag = 'output window, operand 0, single buffered']
    #allocation3 [shape = 's32[1]{0}', space=sflag, size = 0x4, scoped, tag = 'scoped memory for lstm_block.1']
    %11 = vsyncpa [#allocation3], 0
    // Predicated region
    $region2: #{lstm_block.1} parent=1 // pred_check
      _
    $region3: #{lstm_block.1} parent=1 // pred_check_branch
      %13 = sbr.rel (0) target = $region5
    $region4: #{lstm_block.1} parent=1 // pred_region
      _
    $region5: #{lstm_block.1} parent=1 // pred_fallthru
      _
    // Predicated region
    $region6: #{lstm_block.1} parent=1 // pred_check
      _
    $region7: #{lstm_block.1} parent=1 // pred_check_branch
      %15 = sbr.rel (0) target = $region9
    $region8: #{lstm_block.1} parent=1 // pred_region
      _
    $region9: #{lstm_block.1} parent=1 // pred_fallthru
      _
    // Predicated region
    $region10: #{lstm_block.1} parent=1 // pred_check
      _
    $region11: #{lstm_block.1} parent=1 // pred_check_branch
      %17 = sbr.rel (0) target = $region13
    $region12: #{lstm_block.1} parent=1 // pred_region
      _
    $region13: #{lstm_block.1} parent=1 // pred_fallthru
      _
    // Predicated region
    $region14: #{lstm_block.1} parent=1 // pred_check
      _
    $region15: #{lstm_block.1} parent=1 // pred_check_branch
      %19 = sbr.rel (0) target = $region17
    $region16: #{lstm_block.1} parent=1 // pred_region
      _
    $region17: #{lstm_block.1} parent=1 // pred_fallthru
      _
    %v21 = vld [vmem:[%s0] sm:$0xf]
    %v22 = vld [vmem:[%s2] sm:$0xff]
    %v23 = vld [vmem:[%s2 + $0x8] sm:$0xff]
    %v24 = vld [vmem:[%s2 + $0x10] sm:$0xff]
    %v25 = vld [vmem:[%s2 + $0x18] sm:$0xff]
    %v26 = vld [vmem:[%s2 + $0x20] sm:$0xff]
    %v27 = vld [vmem:[%s2 + $0x28] sm:$0xff]
    %v28 = vld [vmem:[%s2 + $0x30] sm:$0xff]
    %v29 = vld [vmem:[%s2 + $0x38] sm:$0xff]
    %v30 = vld [vmem:[%s2 + $0x40] sm:$0xff]
    %v31 = vld [vmem:[%s2 + $0x48] sm:$0xff]
    %v32 = vld [vmem:[%s2 + $0x50] sm:$0xff]
    %v33 = vld [vmem:[%s2 + $0x58] sm:$0xff]
    %v34 = vld [vmem:[%s3] sm:$0xf]
    %v36 = vlaneseq
    %v37 = vshrl.u32 %v36, 7
    %v38 = vsub.s32 0, %v37
    %v39 = vrot.slane %v34, %v38
    %v40 = vlaneseq
    %v41 = vshrl.u32 %v40, 7
    %v42 = vsub.s32 1, %v41
    %v43 = vrot.slane %v34, %v42
    %v44 = vlaneseq
    %v45 = vshrl.u32 %v44, 7
    %v46 = vsub.s32 2, %v45
    %v47 = vrot.slane %v34, %v46
    %v48 = vlaneseq
    %v49 = vshrl.u32 %v48, 7
    %v50 = vsub.s32 3, %v49
    %v51 = vrot.slane %v34, %v50
    %v68 = vunpack.c.l.b16 %v22
    %v69 = vunpack.c.h.b16 %v22
    %v70 = vunpack.c.l.b16 %v23
    %v71 = vunpack.c.h.b16 %v23
    %v72 = vunpack.c.l.b16 %v24
    %v73 = vunpack.c.h.b16 %v24
    %v74 = vunpack.c.l.b16 %v25
    %v75 = vunpack.c.h.b16 %v25
    %v76 = vunpack.c.l.b16 %v26
    %v77 = vunpack.c.h.b16 %v26
    %v78 = vunpack.c.l.b16 %v27
    %v79 = vunpack.c.h.b16 %v27
    %v80 = vunpack.c.l.b16 %v28
    %v81 = vunpack.c.h.b16 %v28
    %v82 = vunpack.c.l.b16 %v29
    %v83 = vunpack.c.h.b16 %v29
    %v84 = vunpack.c.l.b16 %v30
    %v85 = vunpack.c.h.b16 %v30
    %v86 = vunpack.c.l.b16 %v31
    %v87 = vunpack.c.h.b16 %v31
    %v88 = vunpack.c.l.b16 %v32
    %v89 = vunpack.c.h.b16 %v32
    %v90 = vunpack.c.l.b16 %v33
    %v91 = vunpack.c.h.b16 %v33
    %v92 = vpack.c.b16 %v72, %v68
    %v93 = vpack.c.b16 %v73, %v69
    %v94 = vpack.c.b16 %v74, %v70
    %v95 = vpack.c.b16 %v75, %v71
    %v96 = vpack.c.b16 %v80, %v76
    %v97 = vpack.c.b16 %v81, %v77
    %v98 = vpack.c.b16 %v82, %v78
    %v99 = vpack.c.b16 %v83, %v79
    %v100 = vpack.c.b16 %v88, %v84
    %v101 = vpack.c.b16 %v89, %v85
    %v102 = vpack.c.b16 %v90, %v86
    %v103 = vpack.c.b16 %v91, %v87
    %vm116 = vcmask 392192
    %v118 = vsel %vm116, %v21, 0
    %120 = vmatprep.subr.bf16.mxu0 %v93
    %121 = vmatpush1.bf16.msra.mxu0 %v92
    %122 = vmatprep.subr.bf16.mxu0 %v97
    %123 = vmatpush1.bf16.msra.mxu0 %v96
    %124 = vmatprep.subr.bf16.mxu0 %v101
    %125 = vmatpush1.bf16.msra.mxu0 %v100
    %126 = vmatprep.subr.bf16.mxu0 0
    %127 = vmatpush1.bf16.msra.mxu0 0
    %128 = vmatprep.subr.bf16.mxu0 0
    %129 = vmatpush1.bf16.msra.mxu0 0
    %130 = vmatprep.subr.bf16.mxu0 0
    %131 = vmatpush1.bf16.msra.mxu0 0
    %132 = vmatprep.subr.bf16.mxu0 0
    %133 = vmatpush1.bf16.msra.mxu0 0
    %134 = vmatprep.subr.bf16.mxu0 0
    %135 = vmatpush1.bf16.msra.mxu0 0
    %136 = vmatprep.subr.bf16.mxu0 0
    %137 = vmatpush1.bf16.msra.mxu0 0
    %138 = vmatprep.subr.bf16.mxu0 0
    %139 = vmatpush1.bf16.msra.mxu0 0
    %140 = vmatprep.subr.bf16.mxu0 0
    %141 = vmatpush1.bf16.msra.mxu0 0
    %142 = vmatprep.subr.bf16.mxu0 0
    %143 = vmatpush1.bf16.msra.mxu0 0
    %144 = vmatprep.subr.bf16.mxu0 0
    %145 = vmatpush1.bf16.msra.mxu0 0
    %146 = vmatprep.subr.bf16.mxu0 0
    %147 = vmatpush1.bf16.msra.mxu0 0
    %148 = vmatprep.subr.bf16.mxu0 0
    %149 = vmatpush1.bf16.msra.mxu0 0
    %150 = vmatprep.subr.bf16.mxu0 0
    %151 = vmatpush1.bf16.msra.mxu0 0
    %152 = vmatprep.mubr.bf16.mxu0 0
    %153 = vmatmul.mubr.bf16.gmra.mrb[0].mxu0 %v118
    %v154 = vpop.f32.mrb[0].mxu0
    %v155 = vadd.f32 %v39, %v154
    %v156 = vpop.f32.mrb[0].mxu0
    %v157 = vadd.f32 %v43, %v156
    %v158 = vpop.f32.mrb[0].mxu0
    %v159 = vpop.f32.mrb[0].mxu0
    %160 = vdwg.mxu0
    %161 = vmatprep.subr.bf16.mxu0 %v95
    %162 = vmatpush1.bf16.msra.mxu0 %v94
    %163 = vmatprep.subr.bf16.mxu0 %v99
    %164 = vmatpush1.bf16.msra.mxu0 %v98
    %165 = vmatprep.subr.bf16.mxu0 %v103
    %166 = vmatpush1.bf16.msra.mxu0 %v102
    %167 = vmatprep.subr.bf16.mxu0 0
    %168 = vmatpush1.bf16.msra.mxu0 0
    %169 = vmatprep.subr.bf16.mxu0 0
    %170 = vmatpush1.bf16.msra.mxu0 0
    %171 = vmatprep.subr.bf16.mxu0 0
    %172 = vmatpush1.bf16.msra.mxu0 0
    %173 = vmatprep.subr.bf16.mxu0 0
    %174 = vmatpush1.bf16.msra.mxu0 0
    %175 = vmatprep.subr.bf16.mxu0 0
    %176 = vmatpush1.bf16.msra.mxu0 0
    %177 = vmatprep.subr.bf16.mxu0 0
    %178 = vmatpush1.bf16.msra.mxu0 0
    %179 = vmatprep.subr.bf16.mxu0 0
    %180 = vmatpush1.bf16.msra.mxu0 0
    %181 = vmatprep.subr.bf16.mxu0 0
    %182 = vmatpush1.bf16.msra.mxu0 0
    %183 = vmatprep.subr.bf16.mxu0 0
    %184 = vmatpush1.bf16.msra.mxu0 0
    %185 = vmatprep.subr.bf16.mxu0 0
    %186 = vmatpush1.bf16.msra.mxu0 0
    %187 = vmatprep.subr.bf16.mxu0 0
    %188 = vmatpush1.bf16.msra.mxu0 0
    %189 = vmatprep.subr.bf16.mxu0 0
    %190 = vmatpush1.bf16.msra.mxu0 0
    %191 = vmatprep.subr.bf16.mxu0 0
    %192 = vmatpush1.bf16.msra.mxu0 0
    %193 = vmatprep.mubr.bf16.mxu0 0
    %194 = vmatmul.mubr.bf16.gmra.mrb[0].mxu0 %v118
    %v195 = vpop.f32.mrb[0].mxu0
    %v196 = vadd.f32 %v47, %v195
    %v197 = vpop.f32.mrb[0].mxu0
    %v198 = vadd.f32 %v51, %v197
    %v199 = vpop.f32.mrb[0].mxu0
    %v200 = vpop.f32.mrb[0].mxu0
    %201 = vdwg.mxu0
    %v202 = vld [vmem:[%s1] sm:$0xff]
    %v203 = vxor.u32 %v155, 2147483648
    %v204 = vmul.f32 %v203, 1.442695
    %v205 = vpow.pop %v204
    %v206 = vadd.f32 %v205, 1.0
    %v207 = vrcp.pop %v206
    %v208 = vmul.f32 1.0, %v207
    %v209 = vxor.u32 %v157, 2147483648
    %v210 = vmul.f32 %v209, 1.442695
    %v211 = vpow.pop %v210
    %v212 = vadd.f32 %v211, 1.0
    %v213 = vrcp.pop %v212
    %v214 = vmul.f32 1.0, %v213
    %v215 = vtanh.pop %v196
    %v216 = vxor.u32 %v198, 2147483648
    %v217 = vmul.f32 %v216, 1.442695
    %v218 = vpow.pop %v217
    %v219 = vadd.f32 %v218, 1.0
    %v220 = vrcp.pop %v219
    %v221 = vmul.f32 1.0, %v220
    %v222 = vmul.f32 %v202, %v208
    %v223 = vmul.f32 %v214, %v215
    %v224 = vadd.f32 %v222, %v223
    %v225 = vtanh.pop %v224
    %v226 = vmul.f32 %v225, %v221
    %227 = vst [vmem:[#allocation2] sm:$0xff] %v226
    %228 = vst [vmem:[%s5] sm:$0xff] %v224
    // Predicated region
    $region18: #{lstm_block.1} parent=1 // pred_check
      _
    $region19: #{lstm_block.1} parent=1 // pred_check_branch
      %230 = sbr.rel (0) target = $region21
    $region20: #{lstm_block.1} parent=1 // pred_region
      %s232 = ssub.s32 128, 128
      %233 = vsyncadd [#allocation3], %s232
      %s235 = sshll.u32 [#allocation2], 4
      %s236 = int_to_ptr.vmem [resolvable:$true] %s235
      %238 = dma.vmem_to_hbm [thread:$0]  %s236, 128, %s4, [#allocation3]
    $region21: #{lstm_block.1} parent=1 // pred_fallthru
      _
    // Predicated region
    $region22: #{lstm_block.1} parent=1 // pred_check
      _
    $region23: #{lstm_block.1} parent=1 // pred_check_branch
      %240 = sbr.rel (0) target = $region25
    $region24: #{lstm_block.1} parent=1 // pred_region
      _
    $region25: #{lstm_block.1} parent=1 // pred_fallthru
      _
    // Predicated region
    $region26: #{lstm_block.1} parent=1 // pred_check
      _
    $region27: #{lstm_block.1} parent=1 // pred_check_branch
      %242 = sbr.rel (0) target = $region29
    $region28: #{lstm_block.1} parent=1 // pred_region
      %243 = dma.done [#allocation3], 128
    $region29: #{lstm_block.1} parent=1 // pred_fallthru
      _
    // Predicated region
    $region30: #{lstm_block.1} parent=1 // pred_check
      _
    $region31: #{lstm_block.1} parent=1 // pred_check_branch
      %245 = sbr.rel (0) target = $region33
    $region32: #{lstm_block.1} parent=1 // pred_region
      _
    $region33: #{lstm_block.1} parent=1 // pred_fallthru
      _
    %246 = vsyncpa [#allocation3], 1

</llo_original>
